<compile_context>
chip_gen: v7x
topology: tpu7x:2x2x1
jax: 0.10.0
libtpu: 0.0.40
codegen_flags: <defaults>
</compile_context>

<pallas_src>
import jax
import jax.numpy as jnp
from jax.experimental import pallas as pl
from jax.experimental.pallas import tpu as pltpu

INPUT_DIM = 80
EXPANSION = 3
HIDDEN = INPUT_DIM * EXPANSION          # 240
HALF = 256                              # HIDDEN padded to a 128-lane multiple
WIDE = 2 * HALF                         # 512 = fused [a | b] width
MAX_BLOCK_B = 2048                      # batch tile cap (multiple of 8)


def _round_up(x, m):
    return ((x + m - 1) // m) * m


def _select_tiling(batch, max_tb=MAX_BLOCK_B):
    """Adaptive batch tiling: large tiles, minimal padding, >=2 tiles for big B."""
    b8 = _round_up(max(int(batch), 1), 8)
    num_tiles = pl.cdiv(b8, max_tb)
    if num_tiles == 1 and b8 >= 1024:
        num_tiles = 2                    # keep both v7x TensorCores busy
    tb = _round_up(pl.cdiv(b8, num_tiles), 8)
    num_tiles = pl.cdiv(b8, tb)
    return tb, num_tiles


def _swiglu_ranker_kernel(x_ref, w_hi_ref, w_lo_ref, b_ref, b_out_ref, o_ref):
    # x_ref:     (TB, 80)   input dtype  VMEM  batch tile (cast to bf16 in-register)
    # w_hi_ref:  (80, 512)  bf16  VMEM   resident: bf16(w_cat)
    # w_lo_ref:  (80, 512)  bf16  VMEM   resident: bf16(w_cat - f32(w_hi))
    # b_ref:     (1, 512)   f32   VMEM   resident fused bias [b_a*w_out | b_b]
    # b_out_ref: (1, 1)     f32   SMEM   output-layer bias scalar
    # o_ref:     (1, 1, TB) f32   VMEM   lane-dense per-tile scores
    #
    # NOTE: bf16 x is exact because the frequency mask is binary {0,1}.
    # TODO(synk): for non-binary float masks, also hi/lo-split x (4 MXU passes)
    # to keep full f32 fidelity.
    x = x_ref[...].astype(jnp.bfloat16)
    h = jnp.dot(x, w_hi_ref[...], preferred_element_type=jnp.float32)
    h = h + jnp.dot(x, w_lo_ref[...], preferred_element_type=jnp.float32)
    h = h + b_ref[...]
    a = h[:, :HALF]                        # gate branch with folded output projection
    b = h[:, HALF:]
    g = a * (b * jax.nn.sigmoid(b))        # (a * w_out) * SiLU(b); padded lanes are 0
    scores = jnp.sum(g, axis=-1) + b_out_ref[0, 0]          # (TB,) lane reduce (XLU)
    o_ref[...] = scores.reshape(1, 1, -1).astype(o_ref.dtype)


def unconditional_freq_masking_ranker_forward(mask, params, *, max_block_b=MAX_BLOCK_B):
    """mask: (B, 80) -> scores: (B,) float32."""
    B = mask.shape[0]
    assert mask.shape[1] == INPUT_DIM, "mask must have 80 channels"
    if mask.dtype == jnp.bool_:
        mask = mask.astype(jnp.int8)       # bool refs are awkward; int8 is cheap & exact

    TB, num_tiles = _select_tiling(B, max_block_b)

    w_hi = params["w_hi"]       # (80, 512) bf16
    w_lo = params["w_lo"]       # (80, 512) bf16
    b_cat = params["b_cat"]     # (1, 512)  f32
    b_out = params["b_out"]     # (1, 1)    f32

    b_pad = num_tiles * TB
    in_bytes = B * INPUT_DIM * jnp.dtype(mask.dtype).itemsize
    cost = pl.CostEstimate(
        flops=2 * 2 * b_pad * INPUT_DIM * WIDE + 5 * b_pad * HALF,
        transcendentals=b_pad * HALF,
        bytes_accessed=(in_bytes + 2 * INPUT_DIM * WIDE * 2 + WIDE * 4 + 4
                        + b_pad * 4),
    )

    out = pl.pallas_call(
        _swiglu_ranker_kernel,
        out_shape=jax.ShapeDtypeStruct((num_tiles, 1, TB), jnp.float32),
        grid=(num_tiles,),
        in_specs=[
            pl.BlockSpec((TB, INPUT_DIM), lambda i: (i, 0)),         # x: one batch tile / step
            pl.BlockSpec((INPUT_DIM, WIDE), lambda i: (0, 0)),       # w_hi, resident
            pl.BlockSpec((INPUT_DIM, WIDE), lambda i: (0, 0)),       # w_lo, resident
            pl.BlockSpec((1, WIDE), lambda i: (0, 0)),               # fused bias, resident
            pl.BlockSpec(memory_space=pltpu.MemorySpace.SMEM),       # out-layer bias scalar
        ],
        out_specs=pl.BlockSpec((1, 1, TB), lambda i: (i, 0, 0)),     # lane-dense scores
        compiler_params=pltpu.CompilerParams(
            dimension_semantics=("parallel",),
            vmem_limit_bytes=32 << 20,     # explicit: headroom on v5e, default on v6e/v7x
        ),
        cost_estimate=cost,
    )(mask, w_hi, w_lo, b_cat, b_out)

    return out.reshape(num_tiles * TB)[:B]


def prepare_params(raw):
    """Fold out_layer into the gate branch, lane-align the SwiGLU split, bf16-split weights."""
    w_in, b_in, w_out, b_out = raw["w_in"], raw["b_in"], raw["w_out"], raw["b_out"]
    w_a = w_in[:HIDDEN, :].T            # (80, 240)
    w_b = w_in[HIDDEN:, :].T            # (80, 240)
    b_a = b_in[:HIDDEN]
    b_b = b_in[HIDDEN:]
    w_out_vec = w_out[0]                # (240,)
    # Fold the (240 -> 1) projection into the 'a' branch.
    w_a = w_a * w_out_vec[None, :]
    b_a = b_a * w_out_vec
    # Zero-pad 240 -> 256 so each half is 128-lane aligned; padded 'a' lanes are 0
    # so a_pad * SiLU(b_pad) contributes nothing to the reduction.
    pad = HALF - HIDDEN
    w_a = jnp.pad(w_a, ((0, 0), (0, pad)))
    w_b = jnp.pad(w_b, ((0, 0), (0, pad)))
    b_a = jnp.pad(b_a, (0, pad))
    b_b = jnp.pad(b_b, (0, pad))
    w_cat = jnp.concatenate([w_a, w_b], axis=1).astype(jnp.float32)   # (80, 512)
    # 2-pass bf16 split: x @ w_hi + x @ w_lo with f32 accumulation reproduces the
    # f32 matmul to ~f32 precision (exact for binary x) with 2 MXU passes instead of 3.
    w_hi = w_cat.astype(jnp.bfloat16)
    w_lo = (w_cat - w_hi.astype(jnp.float32)).astype(jnp.bfloat16)
    return {
        "w_hi": w_hi,                                                 # (80, 512) bf16
        "w_lo": w_lo,                                                 # (80, 512) bf16
        "b_cat": jnp.concatenate([b_a, b_b]).reshape(1, WIDE).astype(jnp.float32),
        "b_out": b_out.reshape(1, 1).astype(jnp.float32),             # (1, 1)
    }


def init_params(key):
    """Deterministic synthetic params matching nn.Linear shapes.

    PyTorch: in_layer.weight (480, 80), in_layer.bias (480,);
             out_layer.weight (1, 240), out_layer.bias (1,)."""
    k1, k2, k3, k4 = jax.random.split(key, 4)
    bound_in = 1.0 / (INPUT_DIM ** 0.5)
    bound_out = 1.0 / (HIDDEN ** 0.5)
    w_in = jax.random.uniform(k1, (2 * HIDDEN, INPUT_DIM), jnp.float32,
                              minval=-bound_in, maxval=bound_in)
    b_in = jax.random.uniform(k2, (2 * HIDDEN,), jnp.float32,
                              minval=-bound_in, maxval=bound_in)
    w_out = jax.random.uniform(k3, (1, HIDDEN), jnp.float32,
                               minval=-bound_out, maxval=bound_out)
    b_out = jax.random.uniform(k4, (1,), jnp.float32,
                               minval=-bound_out, maxval=bound_out)
    raw = {"w_in": w_in, "b_in": b_in, "w_out": w_out, "b_out": b_out}
    return prepare_params(raw), raw


def _reference_forward(mask, raw):
    """Pure-JAX reference matching the PyTorch module."""
    h = mask.astype(jnp.float32) @ raw["w_in"].T + raw["b_in"]
    a, b = h[:, :HIDDEN], h[:, HIDDEN:]
    c = a * (b * jax.nn.sigmoid(b))
    return (c @ raw["w_out"].T + raw["b_out"]).reshape(mask.shape[0])


if __name__ == "__main__":
    key = jax.random.PRNGKey(0)
    k_params, k_mask = jax.random.split(key)
    params, raw = init_params(k_params)

    B = 8
    # Synthetic frequency masks: binary {0,1} values over the 80 mel channels
    # (matches SpecAugment freq masking with zero_masking=True).
    mask = (jax.random.uniform(k_mask, (B, INPUT_DIM)) > 0.3).astype(jnp.float32)

    scores = unconditional_freq_masking_ranker_forward(mask, params)
    scores = jax.block_until_ready(scores)

    ref = _reference_forward(mask, raw)
    assert scores.shape == (B,)
    assert jnp.allclose(scores, ref, atol=1e-4, rtol=1e-4), (scores, ref)

    print("KERNEL_OK")
</pallas_src>

<mosaic_0001>
module attributes {stable_mosaic.version = 11 : i64} {
  func.func @_swiglu_ranker_kernel(%arg0: i32, %arg1: memref<8x80xf32, #tpu.memory_space<vmem>>, %arg2: memref<80x512xbf16, #tpu.memory_space<vmem>>, %arg3: memref<80x512xbf16, #tpu.memory_space<vmem>>, %arg4: memref<1x512xf32, #tpu.memory_space<vmem>>, %arg5: memref<1x1xf32, #tpu.memory_space<smem>>, %arg6: memref<1x1x8xf32, #tpu.memory_space<vmem>>) attributes {dimension_semantics = [#tpu.dimension_semantics<parallel>], iteration_bounds = array<i64: 1>, scalar_prefetch = 0 : i64, scratch_operands = 0 : i64, tpu.core_type = #tpu.core_type<tc>, window_params = [{transform_indices = @transform_0, window_bounds = array<i64: 8, 80>}, {pipeline_mode = #tpu.pipeline_mode<synchronous>, transform_indices = @transform_1, window_bounds = array<i64: 80, 512>}, {pipeline_mode = #tpu.pipeline_mode<synchronous>, transform_indices = @transform_2, window_bounds = array<i64: 80, 512>}, {pipeline_mode = #tpu.pipeline_mode<synchronous>, transform_indices = @transform_3, window_bounds = array<i64: 1, 512>}, {transform_indices = @transform_4, window_bounds = array<i64: 1, 1>}, {transform_indices = @transform_5, window_bounds = array<i64: 1, 1, 8>}]} {
    %c0 = arith.constant 0 : index
    %c0_0 = arith.constant 0 : index
    %0 = vector.load %arg1[%c0, %c0_0] : memref<8x80xf32, #tpu.memory_space<vmem>>, vector<8x80xf32>
    %1 = arith.truncf %0 : vector<8x80xf32> to vector<8x80xbf16>
    %c0_1 = arith.constant 0 : index
    %c0_2 = arith.constant 0 : index
    %2 = vector.load %arg2[%c0_1, %c0_2] : memref<80x512xbf16, #tpu.memory_space<vmem>>, vector<80x512xbf16>
    %cst = arith.constant dense<0.000000e+00> : vector<8x512xf32>
    %3 = tpu.matmul %1, %2, %cst {dimension_numbers = #tpu.dot_dimension_numbers<[1], [0], [0], [1], [0, 0, 1, 1], [], []>} : vector<8x80xbf16>, vector<80x512xbf16>, vector<8x512xf32> -> vector<8x512xf32>
    %c0_3 = arith.constant 0 : index
    %c0_4 = arith.constant 0 : index
    %4 = vector.load %arg3[%c0_3, %c0_4] : memref<80x512xbf16, #tpu.memory_space<vmem>>, vector<80x512xbf16>
    %cst_5 = arith.constant dense<0.000000e+00> : vector<8x512xf32>
    %5 = tpu.matmul %1, %4, %cst_5 {dimension_numbers = #tpu.dot_dimension_numbers<[1], [0], [0], [1], [0, 0, 1, 1], [], []>} : vector<8x80xbf16>, vector<80x512xbf16>, vector<8x512xf32> -> vector<8x512xf32>
    %6 = arith.addf %3, %5 : vector<8x512xf32>
    %c0_6 = arith.constant 0 : index
    %c0_7 = arith.constant 0 : index
    %7 = vector.load %arg4[%c0_6, %c0_7] : memref<1x512xf32, #tpu.memory_space<vmem>>, vector<1x512xf32>
    %8 = vector.broadcast %7 : vector<1x512xf32> to vector<8x512xf32>
    %9 = arith.addf %6, %8 : vector<8x512xf32>
    %10 = vector.extract_strided_slice %9 {offsets = [0, 0], sizes = [8, 256], strides = [1, 1]} : vector<8x512xf32> to vector<8x256xf32>
    %11 = vector.extract_strided_slice %9 {offsets = [0, 256], sizes = [8, 256], strides = [1, 1]} : vector<8x512xf32> to vector<8x256xf32>
    %12 = arith.negf %11 : vector<8x256xf32>
    %13 = math.exp %12 : vector<8x256xf32>
    %cst_8 = arith.constant 1.000000e+00 : f32
    %14 = vector.broadcast %cst_8 : f32 to vector<8x256xf32>
    %15 = arith.addf %14, %13 : vector<8x256xf32>
    %16 = arith.divf %14, %15 : vector<8x256xf32>
    %17 = arith.mulf %11, %16 : vector<8x256xf32>
    %18 = arith.mulf %10, %17 : vector<8x256xf32>
    %cst_9 = arith.constant dense<0.000000e+00> : vector<8xf32>
    %19 = vector.multi_reduction <add>, %18, %cst_9 [1] : vector<8x256xf32> to vector<8xf32>
    %c0_10 = arith.constant 0 : index
    %c0_11 = arith.constant 0 : index
    %20 = memref.load %arg5[%c0_10, %c0_11] : memref<1x1xf32, #tpu.memory_space<smem>>
    %21 = vector.broadcast %20 : f32 to vector<8xf32>
    %22 = arith.addf %19, %21 : vector<8xf32>
    %23 = vector.shape_cast %22 : vector<8xf32> to vector<1x1x8xf32>
    %c0_12 = arith.constant 0 : index
    %c0_13 = arith.constant 0 : index
    %c0_14 = arith.constant 0 : index
    %24 = vector.load %arg6[%c0_12, %c0_13, %c0_14] : memref<1x1x8xf32, #tpu.memory_space<vmem>>, vector<1x1x8xf32>
    tpu.vector_store %arg6[%c0_12, %c0_13, %c0_14], %23 {strides = array<i32>} : memref<1x1x8xf32, #tpu.memory_space<vmem>>, vector<1x1x8xf32>,
    return
  }
  func.func @transform_0(%arg0: i32) -> (i32, i32) {
    %c0_i32 = arith.constant 0 : i32
    %c0_i32_0 = arith.constant 0 : i32
    return %arg0, %c0_i32 : i32, i32
  }
  func.func @transform_1(%arg0: i32) -> (i32, i32) {
    %c0_i32 = arith.constant 0 : i32
    %c0_i32_0 = arith.constant 0 : i32
    %c0_i32_1 = arith.constant 0 : i32
    return %c0_i32, %c0_i32_0 : i32, i32
  }
  func.func @transform_2(%arg0: i32) -> (i32, i32) {
    %c0_i32 = arith.constant 0 : i32
    %c0_i32_0 = arith.constant 0 : i32
    %c0_i32_1 = arith.constant 0 : i32
    return %c0_i32, %c0_i32_0 : i32, i32
  }
  func.func @transform_3(%arg0: i32) -> (i32, i32) {
    %c0_i32 = arith.constant 0 : i32
    %c0_i32_0 = arith.constant 0 : i32
    %c0_i32_1 = arith.constant 0 : i32
    return %c0_i32, %c0_i32_0 : i32, i32
  }
  func.func @transform_4(%arg0: i32) -> (i32, i32) {
    %c0_i32 = arith.constant 0 : i32
    %c0_i32_0 = arith.constant 0 : i32
    %c0_i32_1 = arith.constant 0 : i32
    return %c0_i32, %c0_i32_0 : i32, i32
  }
  func.func @transform_5(%arg0: i32) -> (i32, i32, i32) {
    %c0_i32 = arith.constant 0 : i32
    %c0_i32_0 = arith.constant 0 : i32
    %c0_i32_1 = arith.constant 0 : i32
    return %arg0, %c0_i32, %c0_i32_0 : i32, i32, i32
  }
}

</mosaic_0001>

<llo_original>
// kernel: tpu_custom_call.1
$region0: #{tpu_custom_call.1}
  #allocation0 [shape = 'u32[]', space=smem, size = 0x4, offset = 0x4, fixed_abs, tag = 'smem constant byte address 0x4 - core index']
  #allocation1 [shape = 'u32[144,128]{1,0:T(1,128)}', space=vmem, size = 0x12000, scoped, tag = 'internal scratch']
  #allocation2 [shape = 'f32[1,1]{1,0:T(1,128)S(6)}', space=smem, size = 0x200, scoped, tag = 'scoped memory for tpu_custom_call.1']
  %s0 = inlined_call_operand.hbm [shape: f32[8,80], index: 0, kind: input, shape index: {}]
  %s1 = inlined_call_operand.hbm [shape: bf16[80,512], index: 1, kind: input, shape index: {}]
  %s2 = inlined_call_operand.hbm [shape: bf16[80,512], index: 2, kind: input, shape index: {}]
  %s3 = inlined_call_operand.vmem [shape: f32[1,512], index: 3, kind: input, shape index: {}]
  %s4 = inlined_call_operand.<no memory space> [shape: f32[1,1], index: 4, kind: input, shape index: {}]
  %s5 = inlined_call_operand.hbm [shape: f32[1,1,8], index: 5, kind: output, shape index: {}]
  %s6 = sld [smem:[#allocation0]]
  $region42: #{tpu_custom_call.1} parent=0
    _
  %s8 = ssub.s32 1, %s6
  %s9 = scalar_select 0, %s8, %s6
  %10 = sst [smem:[#allocation2]] %s4
  $region1: #{tpu_custom_call.1} parent=0
    #allocation3 [shape = 'u8[4096]{0}', space=vmem, size = 0x1000, scoped, tag = 'input window, operand 0, single buffered']
    #allocation4 [shape = 's32[1]{0}', space=sflag, size = 0x4, scoped, tag = 'scoped memory for tpu_custom_call.1']
    #allocation5 [shape = 's32[1]{0}', space=sflag, size = 0x4, scoped, tag = 'scoped memory for tpu_custom_call.1']
    #allocation6 [shape = 'u8[81920]{0}', space=vmem, size = 0x14000, scoped, tag = 'input window, operand 1, single buffered']
    #allocation7 [shape = 's32[1]{0}', space=sflag, size = 0x4, scoped, tag = 'scoped memory for tpu_custom_call.1']
    #allocation8 [shape = 'u8[81920]{0}', space=vmem, size = 0x14000, scoped, tag = 'input window, operand 2, single buffered']
    #allocation9 [shape = 'u8[512]{0}', space=vmem, size = 0x400, scoped, tag = 'output window, operand 0, single buffered']
    %11 = vsyncpa [#allocation4], 0
    %12 = vsyncpa [#allocation7], 0
    %13 = vsyncpa [#allocation5], 0
    // Predicated region
    $region2: #{tpu_custom_call.1} parent=1 // pred_check
      _
    $region3: #{tpu_custom_call.1} parent=1 // pred_check_branch
      %15 = sbr.rel (0) target = $region5
    $region4: #{tpu_custom_call.1} parent=1 // pred_region
      %s17 = ssub.s32 128, 128
      %18 = vsyncadd [#allocation4], %s17
      %s20 = sshll.u32 [#allocation3], 4
      %s21 = int_to_ptr.vmem [resolvable:$true] %s20
      %23 = dma.hbm_to_vmem [thread:$0]  %s0, 128, %s21, [#allocation4]
    $region5: #{tpu_custom_call.1} parent=1 // pred_fallthru
      _
    // Predicated region
    $region6: #{tpu_custom_call.1} parent=1 // pred_check
      _
    $region7: #{tpu_custom_call.1} parent=1 // pred_check_branch
      %25 = sbr.rel (0) target = $region9
    $region8: #{tpu_custom_call.1} parent=1 // pred_region
      %s27 = ssub.s32 2560, 2560
      %28 = vsyncadd [#allocation7], %s27
      %s29 = sshll.u32 [#allocation6], 4
      %s30 = int_to_ptr.vmem [resolvable:$true] %s29
      %35 = dma.hbm_to_vmem [thread:$0]  %s1, 2560, %s30, [#allocation7], 256, 256, 16
    $region9: #{tpu_custom_call.1} parent=1 // pred_fallthru
      _
    // Predicated region
    $region10: #{tpu_custom_call.1} parent=1 // pred_check
      _
    $region11: #{tpu_custom_call.1} parent=1 // pred_check_branch
      %37 = sbr.rel (0) target = $region13
    $region12: #{tpu_custom_call.1} parent=1 // pred_region
      %s39 = ssub.s32 2560, 2560
      %40 = vsyncadd [#allocation7], %s39
      %s41 = sshll.u32 [#allocation8], 4
      %s42 = int_to_ptr.vmem [resolvable:$true] %s41
      %47 = dma.hbm_to_vmem [thread:$0]  %s2, 2560, %s42, [#allocation7], 256, 256, 16
    $region13: #{tpu_custom_call.1} parent=1 // pred_fallthru
      _
    // Predicated region
    $region14: #{tpu_custom_call.1} parent=1 // pred_check
      _
    $region15: #{tpu_custom_call.1} parent=1 // pred_check_branch
      %49 = sbr.rel (0) target = $region17
    $region16: #{tpu_custom_call.1} parent=1 // pred_region
      _
    $region17: #{tpu_custom_call.1} parent=1 // pred_fallthru
      _
    // Predicated region
    $region18: #{tpu_custom_call.1} parent=1 // pred_check
      _
    $region19: #{tpu_custom_call.1} parent=1 // pred_check_branch
      %51 = sbr.rel (0) target = $region21
    $region20: #{tpu_custom_call.1} parent=1 // pred_region
      _
    $region21: #{tpu_custom_call.1} parent=1 // pred_fallthru
      _
    // Predicated region
    $region22: #{tpu_custom_call.1} parent=1 // pred_check
      _
    $region23: #{tpu_custom_call.1} parent=1 // pred_check_branch
      %53 = sbr.rel (0) target = $region25
    $region24: #{tpu_custom_call.1} parent=1 // pred_region
      %54 = dma.done [#allocation4], 128
    $region25: #{tpu_custom_call.1} parent=1 // pred_fallthru
      _
    // Predicated region
    $region26: #{tpu_custom_call.1} parent=1 // pred_check
      _
    $region27: #{tpu_custom_call.1} parent=1 // pred_check_branch
      %56 = sbr.rel (0) target = $region29
    $region28: #{tpu_custom_call.1} parent=1 // pred_region
      %57 = dma.done [#allocation7], 2560
    $region29: #{tpu_custom_call.1} parent=1 // pred_fallthru
      _
    // Predicated region
    $region30: #{tpu_custom_call.1} parent=1 // pred_check
      _
    $region31: #{tpu_custom_call.1} parent=1 // pred_check_branch
      %59 = sbr.rel (0) target = $region33
    $region32: #{tpu_custom_call.1} parent=1 // pred_region
      %60 = dma.done [#allocation7], 2560
    $region33: #{tpu_custom_call.1} parent=1 // pred_fallthru
      _
    %v62 = vld [vmem:[#allocation3] sm:$0xff]
    %v63 = vpack.c.bf16 %v62, %v62
    %v64 = vld [vmem:[#allocation6] sm:$0xff]
    %v65 = vld [vmem:[#allocation6 + $0x8] sm:$0xff]
    %v66 = vld [vmem:[#allocation6 + $0x10] sm:$0xff]
    %v67 = vld [vmem:[#allocation6 + $0x18] sm:$0xff]
    %v68 = vld [vmem:[#allocation6 + $0x20] sm:$0xff]
    %v69 = vld [vmem:[#allocation6 + $0x28] sm:$0xff]
    %v70 = vld [vmem:[#allocation6 + $0x30] sm:$0xff]
    %v71 = vld [vmem:[#allocation6 + $0x38] sm:$0xff]
    %v72 = vld [vmem:[#allocation6 + $0x40] sm:$0xff]
    %v73 = vld [vmem:[#allocation6 + $0x48] sm:$0xff]
    %v74 = vld [vmem:[#allocation6 + $0x50] sm:$0xff]
    %v75 = vld [vmem:[#allocation6 + $0x58] sm:$0xff]
    %v76 = vld [vmem:[#allocation6 + $0x60] sm:$0xff]
    %v77 = vld [vmem:[#allocation6 + $0x68] sm:$0xff]
    %v78 = vld [vmem:[#allocation6 + $0x70] sm:$0xff]
    %v79 = vld [vmem:[#allocation6 + $0x78] sm:$0xff]
    %v80 = vld [vmem:[#allocation6 + $0x80] sm:$0xff]
    %v81 = vld [vmem:[#allocation6 + $0x88] sm:$0xff]
    %v82 = vld [vmem:[#allocation6 + $0x90] sm:$0xff]
    %v83 = vld [vmem:[#allocation6 + $0x98] sm:$0xff]
    %v84 = vld [vmem:[#allocation8] sm:$0xff]
    %v85 = vld [vmem:[#allocation8 + $0x8] sm:$0xff]
    %v86 = vld [vmem:[#allocation8 + $0x10] sm:$0xff]
    %v87 = vld [vmem:[#allocation8 + $0x18] sm:$0xff]
    %v88 = vld [vmem:[#allocation8 + $0x20] sm:$0xff]
    %v89 = vld [vmem:[#allocation8 + $0x28] sm:$0xff]
    %v90 = vld [vmem:[#allocation8 + $0x30] sm:$0xff]
    %v91 = vld [vmem:[#allocation8 + $0x38] sm:$0xff]
    %v92 = vld [vmem:[#allocation8 + $0x40] sm:$0xff]
    %v93 = vld [vmem:[#allocation8 + $0x48] sm:$0xff]
    %v94 = vld [vmem:[#allocation8 + $0x50] sm:$0xff]
    %v95 = vld [vmem:[#allocation8 + $0x58] sm:$0xff]
    %v96 = vld [vmem:[#allocation8 + $0x60] sm:$0xff]
    %v97 = vld [vmem:[#allocation8 + $0x68] sm:$0xff]
    %v98 = vld [vmem:[#allocation8 + $0x70] sm:$0xff]
    %v99 = vld [vmem:[#allocation8 + $0x78] sm:$0xff]
    %v100 = vld [vmem:[#allocation8 + $0x80] sm:$0xff]
    %v101 = vld [vmem:[#allocation8 + $0x88] sm:$0xff]
    %v102 = vld [vmem:[#allocation8 + $0x90] sm:$0xff]
    %v103 = vld [vmem:[#allocation8 + $0x98] sm:$0xff]
    %v124 = vunpack.c.l.b16 %v84
    %v125 = vunpack.c.h.b16 %v84
    %v126 = vunpack.c.l.b16 %v85
    %v127 = vunpack.c.h.b16 %v85
    %v128 = vunpack.c.l.b16 %v86
    %v129 = vunpack.c.h.b16 %v86
    %v130 = vunpack.c.l.b16 %v87
    %v131 = vunpack.c.h.b16 %v87
    %v132 = vunpack.c.l.b16 %v88
    %v133 = vunpack.c.h.b16 %v88
    %v134 = vunpack.c.l.b16 %v89
    %v135 = vunpack.c.h.b16 %v89
    %v136 = vunpack.c.l.b16 %v90
    %v137 = vunpack.c.h.b16 %v90
    %v138 = vunpack.c.l.b16 %v91
    %v139 = vunpack.c.h.b16 %v91
    %v140 = vunpack.c.l.b16 %v92
    %v141 = vunpack.c.h.b16 %v92
    %v142 = vunpack.c.l.b16 %v93
    %v143 = vunpack.c.h.b16 %v93
    %v144 = vunpack.c.l.b16 %v94
    %v145 = vunpack.c.h.b16 %v94
    %v146 = vunpack.c.l.b16 %v95
    %v147 = vunpack.c.h.b16 %v95
    %v148 = vunpack.c.l.b16 %v96
    %v149 = vunpack.c.h.b16 %v96
    %v150 = vunpack.c.l.b16 %v97
    %v151 = vunpack.c.h.b16 %v97
    %v152 = vunpack.c.l.b16 %v98
    %v153 = vunpack.c.h.b16 %v98
    %v154 = vunpack.c.l.b16 %v99
    %v155 = vunpack.c.h.b16 %v99
    %v156 = vunpack.c.l.b16 %v100
    %v157 = vunpack.c.h.b16 %v100
    %v158 = vunpack.c.l.b16 %v101
    %v159 = vunpack.c.h.b16 %v101
    %v160 = vunpack.c.l.b16 %v102
    %v161 = vunpack.c.h.b16 %v102
    %v162 = vunpack.c.l.b16 %v103
    %v163 = vunpack.c.h.b16 %v103
    %v164 = vpack.c.b16 %v128, %v124
    %v165 = vpack.c.b16 %v129, %v125
    %v166 = vpack.c.b16 %v130, %v126
    %v167 = vpack.c.b16 %v131, %v127
    %v168 = vpack.c.b16 %v136, %v132
    %v169 = vpack.c.b16 %v137, %v133
    %v170 = vpack.c.b16 %v138, %v134
    %v171 = vpack.c.b16 %v139, %v135
    %v172 = vpack.c.b16 %v144, %v140
    %v173 = vpack.c.b16 %v145, %v141
    %v174 = vpack.c.b16 %v146, %v142
    %v175 = vpack.c.b16 %v147, %v143
    %v176 = vpack.c.b16 %v152, %v148
    %v177 = vpack.c.b16 %v153, %v149
    %v178 = vpack.c.b16 %v154, %v150
    %v179 = vpack.c.b16 %v155, %v151
    %v180 = vpack.c.b16 %v160, %v156
    %v181 = vpack.c.b16 %v161, %v157
    %v182 = vpack.c.b16 %v162, %v158
    %v183 = vpack.c.b16 %v163, %v159
    %vm204 = vcmask 654336
    %v206 = vsel %vm204, %v63, 0
    %208 = vmatprep.subr.bf16.mxu0 %v165
    %209 = vmatpush1.bf16.msra.mxu0 %v164
    %210 = vmatprep.subr.bf16.mxu0 %v169
    %211 = vmatpush1.bf16.msra.mxu0 %v168
    %212 = vmatprep.subr.bf16.mxu0 %v173
    %213 = vmatpush1.bf16.msra.mxu0 %v172
    %214 = vmatprep.subr.bf16.mxu0 %v177
    %215 = vmatpush1.bf16.msra.mxu0 %v176
    %216 = vmatprep.subr.bf16.mxu0 %v181
    %217 = vmatpush1.bf16.msra.mxu0 %v180
    %218 = vmatprep.subr.bf16.mxu0 0
    %219 = vmatpush1.bf16.msra.mxu0 0
    %220 = vmatprep.subr.bf16.mxu0 0
    %221 = vmatpush1.bf16.msra.mxu0 0
    %222 = vmatprep.subr.bf16.mxu0 0
    %223 = vmatpush1.bf16.msra.mxu0 0
    %224 = vmatprep.subr.bf16.mxu0 0
    %225 = vmatpush1.bf16.msra.mxu0 0
    %226 = vmatprep.subr.bf16.mxu0 0
    %227 = vmatpush1.bf16.msra.mxu0 0
    %228 = vmatprep.subr.bf16.mxu0 0
    %229 = vmatpush1.bf16.msra.mxu0 0
    %230 = vmatprep.subr.bf16.mxu0 0
    %231 = vmatpush1.bf16.msra.mxu0 0
    %232 = vmatprep.subr.bf16.mxu0 0
    %233 = vmatpush1.bf16.msra.mxu0 0
    %234 = vmatprep.subr.bf16.mxu0 0
    %235 = vmatpush1.bf16.msra.mxu0 0
    %236 = vmatprep.subr.bf16.mxu0 0
    %237 = vmatpush1.bf16.msra.mxu0 0
    %238 = vmatprep.subr.bf16.mxu0 0
    %239 = vmatpush1.bf16.msra.mxu0 0
    %240 = vmatprep.mubr.bf16.mxu0 0
    %241 = vmatmul.mubr.bf16.gmra.mrb[0].mxu0 %v206
    %v242 = vpop.f32.mrb[0].mxu0
    %v243 = vadd.f32 0.0, %v242
    %v244 = vpop.f32.mrb[0].mxu0
    %v245 = vadd.f32 0.0, %v244
    %v246 = vpop.f32.mrb[0].mxu0
    %v247 = vpop.f32.mrb[0].mxu0
    %248 = vdwg.mxu0
    %249 = vmatprep.subr.bf16.mxu0 %v167
    %250 = vmatpush1.bf16.msra.mxu0 %v166
    %251 = vmatprep.subr.bf16.mxu0 %v171
    %252 = vmatpush1.bf16.msra.mxu0 %v170
    %253 = vmatprep.subr.bf16.mxu0 %v175
    %254 = vmatpush1.bf16.msra.mxu0 %v174
    %255 = vmatprep.subr.bf16.mxu0 %v179
    %256 = vmatpush1.bf16.msra.mxu0 %v178
    %257 = vmatprep.subr.bf16.mxu0 %v183
    %258 = vmatpush1.bf16.msra.mxu0 %v182
    %259 = vmatprep.subr.bf16.mxu0 0
    %260 = vmatpush1.bf16.msra.mxu0 0
    %261 = vmatprep.subr.bf16.mxu0 0
    %262 = vmatpush1.bf16.msra.mxu0 0
    %263 = vmatprep.subr.bf16.mxu0 0
    %264 = vmatpush1.bf16.msra.mxu0 0
    %265 = vmatprep.subr.bf16.mxu0 0
    %266 = vmatpush1.bf16.msra.mxu0 0
    %267 = vmatprep.subr.bf16.mxu0 0
    %268 = vmatpush1.bf16.msra.mxu0 0
    %269 = vmatprep.subr.bf16.mxu0 0
    %270 = vmatpush1.bf16.msra.mxu0 0
    %271 = vmatprep.subr.bf16.mxu0 0
    %272 = vmatpush1.bf16.msra.mxu0 0
    %273 = vmatprep.subr.bf16.mxu0 0
    %274 = vmatpush1.bf16.msra.mxu0 0
    %275 = vmatprep.subr.bf16.mxu0 0
    %276 = vmatpush1.bf16.msra.mxu0 0
    %277 = vmatprep.subr.bf16.mxu0 0
    %278 = vmatpush1.bf16.msra.mxu0 0
    %279 = vmatprep.subr.bf16.mxu0 0
    %280 = vmatpush1.bf16.msra.mxu0 0
    %281 = vmatprep.mubr.bf16.mxu0 0
    %282 = vmatmul.mubr.bf16.gmra.mrb[0].mxu0 %v206
    %v283 = vpop.f32.mrb[0].mxu0
    %v284 = vadd.f32 0.0, %v283
    %v285 = vpop.f32.mrb[0].mxu0
    %v286 = vadd.f32 0.0, %v285
    %v287 = vpop.f32.mrb[0].mxu0
    %v288 = vpop.f32.mrb[0].mxu0
    %289 = vdwg.mxu0
    %v310 = vunpack.c.l.b16 %v64
    %v311 = vunpack.c.h.b16 %v64
    %v312 = vunpack.c.l.b16 %v65
    %v313 = vunpack.c.h.b16 %v65
    %v314 = vunpack.c.l.b16 %v66
    %v315 = vunpack.c.h.b16 %v66
    %v316 = vunpack.c.l.b16 %v67
    %v317 = vunpack.c.h.b16 %v67
    %v318 = vunpack.c.l.b16 %v68
    %v319 = vunpack.c.h.b16 %v68
    %v320 = vunpack.c.l.b16 %v69
    %v321 = vunpack.c.h.b16 %v69
    %v322 = vunpack.c.l.b16 %v70
    %v323 = vunpack.c.h.b16 %v70
    %v324 = vunpack.c.l.b16 %v71
    %v325 = vunpack.c.h.b16 %v71
    %v326 = vunpack.c.l.b16 %v72
    %v327 = vunpack.c.h.b16 %v72
    %v328 = vunpack.c.l.b16 %v73
    %v329 = vunpack.c.h.b16 %v73
    %v330 = vunpack.c.l.b16 %v74
    %v331 = vunpack.c.h.b16 %v74
    %v332 = vunpack.c.l.b16 %v75
    %v333 = vunpack.c.h.b16 %v75
    %v334 = vunpack.c.l.b16 %v76
    %v335 = vunpack.c.h.b16 %v76
    %v336 = vunpack.c.l.b16 %v77
    %v337 = vunpack.c.h.b16 %v77
    %v338 = vunpack.c.l.b16 %v78
    %v339 = vunpack.c.h.b16 %v78
    %v340 = vunpack.c.l.b16 %v79
    %v341 = vunpack.c.h.b16 %v79
    %v342 = vunpack.c.l.b16 %v80
    %v343 = vunpack.c.h.b16 %v80
    %v344 = vunpack.c.l.b16 %v81
    %v345 = vunpack.c.h.b16 %v81
    %v346 = vunpack.c.l.b16 %v82
    %v347 = vunpack.c.h.b16 %v82
    %v348 = vunpack.c.l.b16 %v83
    %v349 = vunpack.c.h.b16 %v83
    %v350 = vpack.c.b16 %v314, %v310
    %v351 = vpack.c.b16 %v315, %v311
    %v352 = vpack.c.b16 %v316, %v312
    %v353 = vpack.c.b16 %v317, %v313
    %v354 = vpack.c.b16 %v322, %v318
    %v355 = vpack.c.b16 %v323, %v319
    %v356 = vpack.c.b16 %v324, %v320
    %v357 = vpack.c.b16 %v325, %v321
    %v358 = vpack.c.b16 %v330, %v326
    %v359 = vpack.c.b16 %v331, %v327
    %v360 = vpack.c.b16 %v332, %v328
    %v361 = vpack.c.b16 %v333, %v329
    %v362 = vpack.c.b16 %v338, %v334
    %v363 = vpack.c.b16 %v339, %v335
    %v364 = vpack.c.b16 %v340, %v336
    %v365 = vpack.c.b16 %v341, %v337
    %v366 = vpack.c.b16 %v346, %v342
    %v367 = vpack.c.b16 %v347, %v343
    %v368 = vpack.c.b16 %v348, %v344
    %v369 = vpack.c.b16 %v349, %v345
    %390 = vmatprep.subr.bf16.mxu0 %v351
    %391 = vmatpush1.bf16.msra.mxu0 %v350
    %392 = vmatprep.subr.bf16.mxu0 %v355
    %393 = vmatpush1.bf16.msra.mxu0 %v354
    %394 = vmatprep.subr.bf16.mxu0 %v359
    %395 = vmatpush1.bf16.msra.mxu0 %v358
    %396 = vmatprep.subr.bf16.mxu0 %v363
    %397 = vmatpush1.bf16.msra.mxu0 %v362
    %398 = vmatprep.subr.bf16.mxu0 %v367
    %399 = vmatpush1.bf16.msra.mxu0 %v366
    %400 = vmatprep.subr.bf16.mxu0 0
    %401 = vmatpush1.bf16.msra.mxu0 0
    %402 = vmatprep.subr.bf16.mxu0 0
    %403 = vmatpush1.bf16.msra.mxu0 0
    %404 = vmatprep.subr.bf16.mxu0 0
    %405 = vmatpush1.bf16.msra.mxu0 0
    %406 = vmatprep.subr.bf16.mxu0 0
    %407 = vmatpush1.bf16.msra.mxu0 0
    %408 = vmatprep.subr.bf16.mxu0 0
    %409 = vmatpush1.bf16.msra.mxu0 0
    %410 = vmatprep.subr.bf16.mxu0 0
    %411 = vmatpush1.bf16.msra.mxu0 0
    %412 = vmatprep.subr.bf16.mxu0 0
    %413 = vmatpush1.bf16.msra.mxu0 0
    %414 = vmatprep.subr.bf16.mxu0 0
    %415 = vmatpush1.bf16.msra.mxu0 0
    %416 = vmatprep.subr.bf16.mxu0 0
    %417 = vmatpush1.bf16.msra.mxu0 0
    %418 = vmatprep.subr.bf16.mxu0 0
    %419 = vmatpush1.bf16.msra.mxu0 0
    %420 = vmatprep.subr.bf16.mxu0 0
    %421 = vmatpush1.bf16.msra.mxu0 0
    %422 = vmatprep.mubr.bf16.mxu0 0
    %423 = vmatmul.mubr.bf16.gmra.mrb[0].mxu0 %v206
    %v424 = vpop.f32.mrb[0].mxu0
    %v425 = vadd.f32 %v243, %v424
    %v426 = vpop.f32.mrb[0].mxu0
    %v427 = vadd.f32 %v245, %v426
    %v428 = vpop.f32.mrb[0].mxu0
    %v429 = vpop.f32.mrb[0].mxu0
    %430 = vdwg.mxu0
    %431 = vmatprep.subr.bf16.mxu0 %v353
    %432 = vmatpush1.bf16.msra.mxu0 %v352
    %433 = vmatprep.subr.bf16.mxu0 %v357
    %434 = vmatpush1.bf16.msra.mxu0 %v356
    %435 = vmatprep.subr.bf16.mxu0 %v361
    %436 = vmatpush1.bf16.msra.mxu0 %v360
    %437 = vmatprep.subr.bf16.mxu0 %v365
    %438 = vmatpush1.bf16.msra.mxu0 %v364
    %439 = vmatprep.subr.bf16.mxu0 %v369
    %440 = vmatpush1.bf16.msra.mxu0 %v368
    %441 = vmatprep.subr.bf16.mxu0 0
    %442 = vmatpush1.bf16.msra.mxu0 0
    %443 = vmatprep.subr.bf16.mxu0 0
    %444 = vmatpush1.bf16.msra.mxu0 0
    %445 = vmatprep.subr.bf16.mxu0 0
    %446 = vmatpush1.bf16.msra.mxu0 0
    %447 = vmatprep.subr.bf16.mxu0 0
    %448 = vmatpush1.bf16.msra.mxu0 0
    %449 = vmatprep.subr.bf16.mxu0 0
    %450 = vmatpush1.bf16.msra.mxu0 0
    %451 = vmatprep.subr.bf16.mxu0 0
    %452 = vmatpush1.bf16.msra.mxu0 0
    %453 = vmatprep.subr.bf16.mxu0 0
    %454 = vmatpush1.bf16.msra.mxu0 0
    %455 = vmatprep.subr.bf16.mxu0 0
    %456 = vmatpush1.bf16.msra.mxu0 0
    %457 = vmatprep.subr.bf16.mxu0 0
    %458 = vmatpush1.bf16.msra.mxu0 0
    %459 = vmatprep.subr.bf16.mxu0 0
    %460 = vmatpush1.bf16.msra.mxu0 0
    %461 = vmatprep.subr.bf16.mxu0 0
    %462 = vmatpush1.bf16.msra.mxu0 0
    %463 = vmatprep.mubr.bf16.mxu0 0
    %464 = vmatmul.mubr.bf16.gmra.mrb[0].mxu0 %v206
    %v465 = vpop.f32.mrb[0].mxu0
    %v466 = vadd.f32 %v284, %v465
    %v467 = vpop.f32.mrb[0].mxu0
    %v468 = vadd.f32 %v286, %v467
    %v469 = vpop.f32.mrb[0].mxu0
    %v470 = vpop.f32.mrb[0].mxu0
    %471 = vdwg.mxu0
    %v472 = vld [vmem:[%s3] sm:$0xf]
    %v474 = vlaneseq
    %v475 = vshrl.u32 %v474, 7
    %v476 = vsub.s32 0, %v475
    %v477 = vrot.slane %v472, %v476
    %v478 = vlaneseq
    %v479 = vshrl.u32 %v478, 7
    %v480 = vsub.s32 1, %v479
    %v481 = vrot.slane %v472, %v480
    %v482 = vlaneseq
    %v483 = vshrl.u32 %v482, 7
    %v484 = vsub.s32 2, %v483
    %v485 = vrot.slane %v472, %v484
    %v486 = vlaneseq
    %v487 = vshrl.u32 %v486, 7
    %v488 = vsub.s32 3, %v487
    %v489 = vrot.slane %v472, %v488
    %v494 = vadd.f32 %v425, %v477
    %v495 = vadd.f32 %v427, %v481
    %v496 = vadd.f32 %v466, %v485
    %v497 = vadd.f32 %v468, %v489
    %v498 = vxor.u32 %v496, 2147483648
    %v499 = vxor.u32 %v497, 2147483648
    %v500 = vmul.f32 %v498, 1.442695
    %v501 = vpow.pop %v500
    %v502 = vmul.f32 %v499, 1.442695
    %v503 = vpow.pop %v502
    %v504 = vadd.f32 %v501, 1.0
    %v505 = vadd.f32 %v503, 1.0
    %v506 = vrcp.pop %v504
    %v507 = vmul.f32 1.0, %v506
    %v508 = vrcp.pop %v505
    %v509 = vmul.f32 1.0, %v508
    %v510 = vmul.f32 %v496, %v507
    %v511 = vmul.f32 %v497, %v509
    %v512 = vmul.f32 %v494, %v510
    %v513 = vmul.f32 %v495, %v511
    %v514 = vadd.f32 %v512, %v513
    %515 = vadd.xlane.f32.xlu0 %v514
    %v516 = vpop.xlane.xlu0 %515
    %s517 = sld [smem:[#allocation2]]
    %v518 = vstv %s517
    %v519 = vadd.f32 %v516, %v518
    %v521 = vlaneseq
    %v522 = vand.u32 %v521, 127
    %v523 = vlaneseq
    %v524 = vshrl.u32 %v523, 7
    %v525 = vsub.s32 %v522, %v524
    %v526 = vrot.slane %v519, %v525
    %vm528 = vcmask 57344
    %529 = vst.msk [vmem:[#allocation9] sm:$0x1] %vm528, %v526
    // Predicated region
    $region34: #{tpu_custom_call.1} parent=1 // pred_check
      _
    $region35: #{tpu_custom_call.1} parent=1 // pred_check_branch
      %531 = sbr.rel (0) target = $region37
    $region36: #{tpu_custom_call.1} parent=1 // pred_region
      %s533 = ssub.s32 16, 16
      %534 = vsyncadd [#allocation5], %s533
      %s536 = sshll.u32 [#allocation9], 4
      %s537 = int_to_ptr.vmem [resolvable:$true] %s536
      %539 = dma.vmem_to_hbm [thread:$0]  %s537, 16, %s5, [#allocation5]
    $region37: #{tpu_custom_call.1} parent=1 // pred_fallthru
      _
    // Predicated region
    $region38: #{tpu_custom_call.1} parent=1 // pred_check
      _
    $region39: #{tpu_custom_call.1} parent=1 // pred_check_branch
      %541 = sbr.rel (0) target = $region41
    $region40: #{tpu_custom_call.1} parent=1 // pred_region
      %542 = dma.done [#allocation5], 16
    $region41: #{tpu_custom_call.1} parent=1 // pred_fallthru
      _
    %543 = vsyncpa [#allocation4], 1
    %544 = vsyncpa [#allocation7], 1
    %545 = vsyncpa [#allocation5], 1

</llo_original>
